<compile_context>
chip_gen: v5e
topology: v5e:2x2
jax: 0.10.0
libtpu: 0.0.40
codegen_flags: <defaults>
</compile_context>

<pallas_src>
import functools

import jax
import jax.numpy as jnp
from jax import lax
from jax.experimental import pallas as pl
from jax.experimental.pallas import tpu as pltpu

_DEFAULT_BLOCK_B = 1024  # batch-tile cap; VMEM-safe on v5e/v6e/v7x with defaults


def _logreg_kernel(x_ref, w_ref, b_ref, o_ref, *, precision):
    # One MXU matmul per batch tile.  x is cast to the weight dtype in VMEM
    # (free-ish VPU work) so the MXU runs single-pass bf16 on the default path;
    # accumulation and the bias add are f32.
    x = x_ref[...].astype(w_ref.dtype)
    acc = lax.dot_general(
        x, w_ref[...],
        dimension_numbers=(((1,), (0,)), ((), ())),
        preferred_element_type=jnp.float32,
        precision=precision,
    )
    o_ref[...] = (acc + b_ref[...]).astype(o_ref.dtype)


def _prepare_params(weight, bias, compute_dtype):
    """Transpose/cast nn.Linear params once: W (10,784) -> (784,10), b -> (1,10)."""
    out_dim, in_features = weight.shape
    w_t = weight.T.astype(compute_dtype)                       # (784, 10)
    b_row = bias.astype(jnp.float32).reshape(1, out_dim)       # (1, 10), f32 add
    return w_t, b_row


def _forward_pallas(x2d, w_t, b_row, *, block_batch=_DEFAULT_BLOCK_B):
    B, in_features = x2d.shape
    in_features_w, out_dim = w_t.shape
    assert in_features_w == in_features
    compute_dtype = w_t.dtype

    # Pin MXU precision explicitly: single-pass for bf16, HIGHEST (multi-pass
    # f32 emulation) for f32 operands to match PyTorch f32 numerics.
    precision = (lax.Precision.HIGHEST if compute_dtype == jnp.float32
                 else lax.Precision.DEFAULT)

    # Batch tile: multiple of 8 sublanes; prefer >= 2 grid tiles so the
    # 'parallel' batch axis can shard across v7x's two TensorCores even for
    # mid-size batches.  Partial trailing tiles are clipped by Pallas (rows
    # are independent, so padded rows never reach HBM).
    rows_per_tile = pl.cdiv(B, 2) if B > 8 else B
    tb = min(block_batch, max(8, ((rows_per_tile + 7) // 8) * 8))
    grid = (pl.cdiv(B, tb),)

    kernel = functools.partial(_logreg_kernel, precision=precision)

    x_item = jnp.dtype(x2d.dtype).itemsize
    w_item = jnp.dtype(compute_dtype).itemsize

    return pl.pallas_call(
        kernel,
        out_shape=jax.ShapeDtypeStruct((B, out_dim), jnp.float32),
        grid_spec=pltpu.PrefetchScalarGridSpec(
            num_scalar_prefetch=0,
            grid=grid,
            in_specs=[
                # x: one batch tile per grid step (double-buffered by Pallas).
                pl.BlockSpec((tb, in_features), lambda i: (i, 0)),
                # weight / bias: constant block index -> stay resident in VMEM.
                pl.BlockSpec((in_features, out_dim), lambda i: (0, 0)),
                pl.BlockSpec((1, out_dim), lambda i: (0, 0)),
            ],
            # Direct (B, 10) output: no padded slab, no wrapper slice.
            out_specs=pl.BlockSpec((tb, out_dim), lambda i: (i, 0)),
        ),
        compiler_params=pltpu.CompilerParams(
            # Independent batch tiles: shards across v7x's two TCs.
            dimension_semantics=("parallel",)),
        cost_estimate=pl.CostEstimate(
            flops=2 * B * in_features * out_dim,
            bytes_accessed=(B * in_features * x_item
                            + in_features * out_dim * w_item
                            + B * out_dim * 4),
            transcendentals=0,
        ),
    )(x2d, w_t, b_row)


def logistic_regression_mnist(x, weight, bias, *,
                              compute_dtype=jnp.bfloat16,
                              block_batch=_DEFAULT_BLOCK_B,
                              use_pallas=None):
    """Forward pass of LogisticRegression_MNIST.

    x:      (B, 1, 28, 28) or anything whose rows flatten to 784 features
            (f32 or bf16 — bf16 input halves the dominant HBM read).
    weight: (10, 784)  -- PyTorch nn.Linear layout.
    bias:   (10,)
    compute_dtype: dtype of the MXU operands (bf16 default; f32 for parity).
    returns (B, 10) float32.
    """
    out_dim, in_features = weight.shape
    assert x.size % in_features == 0, (
        f"input of {x.size} elements does not flatten to rows of {in_features}")
    x2d = x.reshape(-1, in_features)
    B = x2d.shape[0]

    w_t, b_row = _prepare_params(weight, bias, compute_dtype)

    if use_pallas is None:
        use_pallas = B >= 512
    if not use_pallas:
        # Tiny-batch fast path: Pallas per-step overhead would dominate.
        acc = jnp.dot(x2d.astype(compute_dtype), w_t,
                      preferred_element_type=jnp.float32)
        return acc + b_row

    return _forward_pallas(x2d, w_t, b_row, block_batch=block_batch)


def make_forward(weight, bias, *, compute_dtype=jnp.bfloat16,
                 block_batch=_DEFAULT_BLOCK_B):
    """Hoisted-parameter entry point: prepares W/b once, returns jitted fn(x)."""
    in_features = weight.shape[1]
    w_t, b_row = _prepare_params(weight, bias, compute_dtype)

    @jax.jit
    def forward(x):
        x2d = x.reshape(-1, in_features)
        return _forward_pallas(x2d, w_t, b_row, block_batch=block_batch)

    return forward


def _init_params(key, input_dim=1, output_dim=10):
    # Deterministic init matching nn.Linear shapes: W (10, 784), b (10,)
    in_features = input_dim * 28 * 28
    kw, kb = jax.random.split(key)
    bound = 1.0 / jnp.sqrt(in_features)
    weight = jax.random.uniform(kw, (output_dim, in_features),
                                minval=-bound, maxval=bound, dtype=jnp.float32)
    bias = jax.random.uniform(kb, (output_dim,),
                              minval=-bound, maxval=bound, dtype=jnp.float32)
    return weight, bias


if __name__ == "__main__":
    key = jax.random.PRNGKey(0)
    kx, kp = jax.random.split(key)

    # Small batch of MNIST-shaped inputs (NCHW), f32 like the PyTorch module.
    x = jax.random.normal(kx, (2, 1, 28, 28), dtype=jnp.float32)
    weight, bias = _init_params(kp)

    # Reference (plain JAX, f32).
    ref = x.reshape(-1, 784) @ weight.T + bias

    # Primary path: bf16 MXU operands, f32 accumulation, hoisted params.
    forward = make_forward(weight, bias)          # default compute_dtype=bf16
    out_bf16 = jax.block_until_ready(forward(x))
    assert out_bf16.shape == (2, 10)
    assert out_bf16.dtype == jnp.float32
    assert jnp.allclose(out_bf16, ref, atol=3e-2, rtol=3e-2)

    # f32-parity path: precision pinned to HIGHEST inside the kernel.
    out_f32 = logistic_regression_mnist(x, weight, bias,
                                        compute_dtype=jnp.float32,
                                        use_pallas=True)
    out_f32 = jax.block_until_ready(out_f32)
    assert out_f32.shape == (2, 10)
    assert jnp.allclose(out_f32, ref, atol=1e-4, rtol=1e-4)

    print("KERNEL_OK")
</pallas_src>

<mosaic_0001>
module attributes {stable_mosaic.version = 11 : i64} {
  func.func @_logreg_kernel(%arg0: i32, %arg1: memref<8x784xf32, #tpu.memory_space<vmem>>, %arg2: memref<784x10xbf16, #tpu.memory_space<vmem>>, %arg3: memref<1x10xf32, #tpu.memory_space<vmem>>, %arg4: memref<8x10xf32, #tpu.memory_space<vmem>>) attributes {dimension_semantics = [#tpu.dimension_semantics<parallel>], iteration_bounds = array<i64: 1>, scalar_prefetch = 0 : i64, scratch_operands = 0 : i64, tpu.core_type = #tpu.core_type<tc>, window_params = [{transform_indices = @transform_0, window_bounds = array<i64: 8, 784>}, {pipeline_mode = #tpu.pipeline_mode<synchronous>, transform_indices = @transform_1, window_bounds = array<i64: 784, 10>}, {pipeline_mode = #tpu.pipeline_mode<synchronous>, transform_indices = @transform_2, window_bounds = array<i64: 1, 10>}, {transform_indices = @transform_3, window_bounds = array<i64: 8, 10>}]} {
    %c0 = arith.constant 0 : index
    %c0_0 = arith.constant 0 : index
    %0 = vector.load %arg1[%c0, %c0_0] : memref<8x784xf32, #tpu.memory_space<vmem>>, vector<8x784xf32>
    %1 = arith.truncf %0 : vector<8x784xf32> to vector<8x784xbf16>
    %c0_1 = arith.constant 0 : index
    %c0_2 = arith.constant 0 : index
    %2 = vector.load %arg2[%c0_1, %c0_2] : memref<784x10xbf16, #tpu.memory_space<vmem>>, vector<784x10xbf16>
    %cst = arith.constant dense<0.000000e+00> : vector<8x10xf32>
    %3 = tpu.matmul %1, %2, %cst {dimension_numbers = #tpu.dot_dimension_numbers<[1], [0], [0], [1], [0, 0, 1, 1], [], []>} : vector<8x784xbf16>, vector<784x10xbf16>, vector<8x10xf32> -> vector<8x10xf32>
    %c0_3 = arith.constant 0 : index
    %c0_4 = arith.constant 0 : index
    %4 = vector.load %arg3[%c0_3, %c0_4] : memref<1x10xf32, #tpu.memory_space<vmem>>, vector<1x10xf32>
    %5 = vector.broadcast %4 : vector<1x10xf32> to vector<8x10xf32>
    %6 = arith.addf %3, %5 : vector<8x10xf32>
    %c0_5 = arith.constant 0 : index
    %c0_6 = arith.constant 0 : index
    %7 = vector.load %arg4[%c0_5, %c0_6] : memref<8x10xf32, #tpu.memory_space<vmem>>, vector<8x10xf32>
    tpu.vector_store %arg4[%c0_5, %c0_6], %6 {strides = array<i32>} : memref<8x10xf32, #tpu.memory_space<vmem>>, vector<8x10xf32>,
    return
  }
  func.func @transform_0(%arg0: i32) -> (i32, i32) {
    %c0_i32 = arith.constant 0 : i32
    %c0_i32_0 = arith.constant 0 : i32
    return %arg0, %c0_i32 : i32, i32
  }
  func.func @transform_1(%arg0: i32) -> (i32, i32) {
    %c0_i32 = arith.constant 0 : i32
    %c0_i32_0 = arith.constant 0 : i32
    %c0_i32_1 = arith.constant 0 : i32
    return %c0_i32, %c0_i32_0 : i32, i32
  }
  func.func @transform_2(%arg0: i32) -> (i32, i32) {
    %c0_i32 = arith.constant 0 : i32
    %c0_i32_0 = arith.constant 0 : i32
    %c0_i32_1 = arith.constant 0 : i32
    return %c0_i32, %c0_i32_0 : i32, i32
  }
  func.func @transform_3(%arg0: i32) -> (i32, i32) {
    %c0_i32 = arith.constant 0 : i32
    %c0_i32_0 = arith.constant 0 : i32
    return %arg0, %c0_i32 : i32, i32
  }
}

</mosaic_0001>

<llo_original>
// kernel: forward.1
$region0: #{forward.1}
  #allocation0 [shape = 'u32[]', space=smem, size = 0x4, offset = 0x4, fixed_abs, tag = 'smem constant byte address 0x4 - core index']
  #allocation1 [shape = 'u32[72,128]{1,0:T(1,128)}', space=vmem, size = 0x9000, scoped, tag = 'internal scratch']
  %s0 = inlined_call_operand.vmem [shape: f32[2,784], index: 0, kind: input, shape index: {}]
  %s1 = inlined_call_operand.hbm [shape: bf16[784,10], index: 1, kind: input, shape index: {}]
  %s2 = inlined_call_operand.vmem [shape: f32[1,10], index: 2, kind: input, shape index: {}]
  %s3 = inlined_call_operand.hbm [shape: f32[2,10], index: 3, kind: output, shape index: {}]
  %s4 = sld [smem:[#allocation0]]
  $region26: #{forward.1} parent=0
    _
  %s6 = ssub.s32 1, %s4
  %s7 = scalar_select 0, %s6, %s4
  $region1: #{forward.1} parent=0
    #allocation2 [shape = 'u8[200704]{0}', space=vmem, size = 0x31000, scoped, tag = 'input window, operand 1, single buffered']
    #allocation3 [shape = 's32[1]{0}', space=sflag, size = 0x4, scoped, tag = 'scoped memory for forward.1']
    #allocation4 [shape = 's32[1]{0}', space=sflag, size = 0x4, scoped, tag = 'scoped memory for forward.1']
    #allocation5 [shape = 'u8[4096]{0}', space=vmem, size = 0x1000, scoped, tag = 'output window, operand 0, single buffered']
    %8 = vsyncpa [#allocation3], 0
    %9 = vsyncpa [#allocation4], 0
    // Predicated region
    $region2: #{forward.1} parent=1 // pred_check
      _
    $region3: #{forward.1} parent=1 // pred_check_branch
      %11 = sbr.rel (0) target = $region5
    $region4: #{forward.1} parent=1 // pred_region
      _
    $region5: #{forward.1} parent=1 // pred_fallthru
      _
    // Predicated region
    $region6: #{forward.1} parent=1 // pred_check
      _
    $region7: #{forward.1} parent=1 // pred_check_branch
      %13 = sbr.rel (0) target = $region9
    $region8: #{forward.1} parent=1 // pred_region
      %15 = vsyncadd [#allocation3], 0
      %s16 = sshll.u32 %s1, 4
      %s17 = int_to_ptr.hbm [resolvable:$true] %s16
      %s18 = sshll.u32 [#allocation2], 4
      %s19 = int_to_ptr.vmem [resolvable:$true] %s18
      %24 = dma.hbm_to_vmem [thread:$0]  %s17, 6272, %s19, [#allocation3], 64, 64, 4
    $region9: #{forward.1} parent=1 // pred_fallthru
      _
    // Predicated region
    $region10: #{forward.1} parent=1 // pred_check
      _
    $region11: #{forward.1} parent=1 // pred_check_branch
      %26 = sbr.rel (0) target = $region13
    $region12: #{forward.1} parent=1 // pred_region
      _
    $region13: #{forward.1} parent=1 // pred_fallthru
      _
    // Predicated region
    $region14: #{forward.1} parent=1 // pred_check
      _
    $region15: #{forward.1} parent=1 // pred_check_branch
      %28 = sbr.rel (0) target = $region17
    $region16: #{forward.1} parent=1 // pred_region
      %30 = dma.done [#allocation3], 6272
    $region17: #{forward.1} parent=1 // pred_fallthru
      _
    %v32 = vld [vmem:[%s0] sm:$0xff]
    %v33 = vld [vmem:[%s0 + $0x8] sm:$0x3f]
    %v34 = vld [vmem:[%s0 + $0xe] sm:$0xff]
    %v35 = vld [vmem:[%s0 + $0x16] sm:$0x3f]
    %v36 = vld [vmem:[%s0 + $0x1c] sm:$0xff]
    %v37 = vld [vmem:[%s0 + $0x24] sm:$0x3f]
    %v38 = vld [vmem:[%s0 + $0x2a] sm:$0xff]
    %v39 = vld [vmem:[%s0 + $0x32] sm:$0x3f]
    %48 = vst [vmem:[#allocation1] ss:$4 sm:$0xff] %v32
    %s49 = scalar_lea.vmem [#allocation1], 1
    %50 = vst [vmem:[%s49] ss:$4 sm:$0xff] %v34
    %s51 = scalar_lea.vmem [#allocation1], 2
    %52 = vst [vmem:[%s51] ss:$4 sm:$0xff] %v36
    %s53 = scalar_lea.vmem [#allocation1], 3
    %54 = vst [vmem:[%s53] ss:$4 sm:$0xff] %v38
    %s55 = scalar_lea.vmem [#allocation1], 32
    %56 = vst [vmem:[%s55] ss:$4 sm:$0xff] %v33
    %s57 = scalar_lea.vmem [#allocation1], 33
    %58 = vst [vmem:[%s57] ss:$4 sm:$0xff] %v35
    %s59 = scalar_lea.vmem [#allocation1], 34
    %60 = vst [vmem:[%s59] ss:$4 sm:$0xff] %v37
    %s61 = scalar_lea.vmem [#allocation1], 35
    %62 = vst [vmem:[%s61] ss:$4 sm:$0xff] %v39
    %v63 = vld.sshfl [vmem:[#allocation1] sm:$0xff pattern:$0x73625140]
    %v64 = vld.sshfl [vmem:[#allocation1 + $0x8] sm:$0xff pattern:$0x73625140]
    %v65 = vld.sshfl [vmem:[#allocation1 + $0x10] sm:$0xff pattern:$0x73625140]
    %v66 = vld.sshfl [vmem:[#allocation1 + $0x18] sm:$0xff pattern:$0x73625140]
    %v67 = vld.sshfl [vmem:[#allocation1 + $0x20] sm:$0xff pattern:$0x73625140]
    %v68 = vld.sshfl [vmem:[#allocation1 + $0x28] sm:$0xff pattern:$0x73625140]
    %v69 = vld.sshfl [vmem:[#allocation1 + $0x30] sm:$0xff pattern:$0x73625140]
    %v77 = vpack.c.bf16 %v63, %v63
    %v78 = vpack.c.bf16 %v64, %v64
    %v79 = vpack.c.bf16 %v65, %v65
    %v80 = vpack.c.bf16 %v66, %v66
    %v81 = vpack.c.bf16 %v67, %v67
    %v82 = vpack.c.bf16 %v68, %v68
    %v83 = vpack.c.bf16 %v69, %v69
    %v84 = vld [vmem:[#allocation2] sm:$0xf]
    %v85 = vld [vmem:[#allocation2 + $0x4] sm:$0xf]
    %v86 = vld [vmem:[#allocation2 + $0x8] sm:$0xf]
    %v87 = vld [vmem:[#allocation2 + $0xc] sm:$0xf]
    %v88 = vld [vmem:[#allocation2 + $0x10] sm:$0xf]
    %v89 = vld [vmem:[#allocation2 + $0x14] sm:$0xf]
    %v90 = vld [vmem:[#allocation2 + $0x18] sm:$0xf]
    %v91 = vld [vmem:[#allocation2 + $0x1c] sm:$0xf]
    %v92 = vld [vmem:[#allocation2 + $0x20] sm:$0xf]
    %v93 = vld [vmem:[#allocation2 + $0x24] sm:$0xf]
    %v94 = vld [vmem:[#allocation2 + $0x28] sm:$0xf]
    %v95 = vld [vmem:[#allocation2 + $0x2c] sm:$0xf]
    %v96 = vld [vmem:[#allocation2 + $0x30] sm:$0xf]
    %v97 = vld [vmem:[#allocation2 + $0x34] sm:$0xf]
    %v98 = vld [vmem:[#allocation2 + $0x38] sm:$0xf]
    %v99 = vld [vmem:[#allocation2 + $0x3c] sm:$0xf]
    %v100 = vld [vmem:[#allocation2 + $0x40] sm:$0xf]
    %v101 = vld [vmem:[#allocation2 + $0x44] sm:$0xf]
    %v102 = vld [vmem:[#allocation2 + $0x48] sm:$0xf]
    %v103 = vld [vmem:[#allocation2 + $0x4c] sm:$0xf]
    %v104 = vld [vmem:[#allocation2 + $0x50] sm:$0xf]
    %v105 = vld [vmem:[#allocation2 + $0x54] sm:$0xf]
    %v106 = vld [vmem:[#allocation2 + $0x58] sm:$0xf]
    %v107 = vld [vmem:[#allocation2 + $0x5c] sm:$0xf]
    %v108 = vld [vmem:[#allocation2 + $0x60] sm:$0xf]
    %v109 = vld [vmem:[#allocation2 + $0x64] sm:$0xf]
    %v110 = vld [vmem:[#allocation2 + $0x68] sm:$0xf]
    %v111 = vld [vmem:[#allocation2 + $0x6c] sm:$0xf]
    %v112 = vld [vmem:[#allocation2 + $0x70] sm:$0xf]
    %v113 = vld [vmem:[#allocation2 + $0x74] sm:$0xf]
    %v114 = vld [vmem:[#allocation2 + $0x78] sm:$0xf]
    %v115 = vld [vmem:[#allocation2 + $0x7c] sm:$0xf]
    %v116 = vld [vmem:[#allocation2 + $0x80] sm:$0xf]
    %v117 = vld [vmem:[#allocation2 + $0x84] sm:$0xf]
    %v118 = vld [vmem:[#allocation2 + $0x88] sm:$0xf]
    %v119 = vld [vmem:[#allocation2 + $0x8c] sm:$0xf]
    %v120 = vld [vmem:[#allocation2 + $0x90] sm:$0xf]
    %v121 = vld [vmem:[#allocation2 + $0x94] sm:$0xf]
    %v122 = vld [vmem:[#allocation2 + $0x98] sm:$0xf]
    %v123 = vld [vmem:[#allocation2 + $0x9c] sm:$0xf]
    %v124 = vld [vmem:[#allocation2 + $0xa0] sm:$0xf]
    %v125 = vld [vmem:[#allocation2 + $0xa4] sm:$0xf]
    %v126 = vld [vmem:[#allocation2 + $0xa8] sm:$0xf]
    %v127 = vld [vmem:[#allocation2 + $0xac] sm:$0xf]
    %v128 = vld [vmem:[#allocation2 + $0xb0] sm:$0xf]
    %v129 = vld [vmem:[#allocation2 + $0xb4] sm:$0xf]
    %v130 = vld [vmem:[#allocation2 + $0xb8] sm:$0xf]
    %v131 = vld [vmem:[#allocation2 + $0xbc] sm:$0xf]
    %v132 = vld [vmem:[#allocation2 + $0xc0] sm:$0xf]
    %v133 = vld [vmem:[#allocation2 + $0xc4] sm:$0xf]
    %v134 = vld [vmem:[#allocation2 + $0xc8] sm:$0xf]
    %v135 = vld [vmem:[#allocation2 + $0xcc] sm:$0xf]
    %v136 = vld [vmem:[#allocation2 + $0xd0] sm:$0xf]
    %v137 = vld [vmem:[#allocation2 + $0xd4] sm:$0xf]
    %v138 = vld [vmem:[#allocation2 + $0xd8] sm:$0xf]
    %v139 = vld [vmem:[#allocation2 + $0xdc] sm:$0xf]
    %v140 = vld [vmem:[#allocation2 + $0xe0] sm:$0xf]
    %v141 = vld [vmem:[#allocation2 + $0xe4] sm:$0xf]
    %v142 = vld [vmem:[#allocation2 + $0xe8] sm:$0xf]
    %v143 = vld [vmem:[#allocation2 + $0xec] sm:$0xf]
    %v144 = vld [vmem:[#allocation2 + $0xf0] sm:$0xf]
    %v145 = vld [vmem:[#allocation2 + $0xf4] sm:$0xf]
    %v146 = vld [vmem:[#allocation2 + $0xf8] sm:$0xf]
    %v147 = vld [vmem:[#allocation2 + $0xfc] sm:$0xf]
    %v148 = vld [vmem:[#allocation2 + $0x100] sm:$0xf]
    %v149 = vld [vmem:[#allocation2 + $0x104] sm:$0xf]
    %v150 = vld [vmem:[#allocation2 + $0x108] sm:$0xf]
    %v151 = vld [vmem:[#allocation2 + $0x10c] sm:$0xf]
    %v152 = vld [vmem:[#allocation2 + $0x110] sm:$0xf]
    %v153 = vld [vmem:[#allocation2 + $0x114] sm:$0xf]
    %v154 = vld [vmem:[#allocation2 + $0x118] sm:$0xf]
    %v155 = vld [vmem:[#allocation2 + $0x11c] sm:$0xf]
    %v156 = vld [vmem:[#allocation2 + $0x120] sm:$0xf]
    %v157 = vld [vmem:[#allocation2 + $0x124] sm:$0xf]
    %v158 = vld [vmem:[#allocation2 + $0x128] sm:$0xf]
    %v159 = vld [vmem:[#allocation2 + $0x12c] sm:$0xf]
    %v160 = vld [vmem:[#allocation2 + $0x130] sm:$0xf]
    %v161 = vld [vmem:[#allocation2 + $0x134] sm:$0xf]
    %v162 = vld [vmem:[#allocation2 + $0x138] sm:$0xf]
    %v163 = vld [vmem:[#allocation2 + $0x13c] sm:$0xf]
    %v164 = vld [vmem:[#allocation2 + $0x140] sm:$0xf]
    %v165 = vld [vmem:[#allocation2 + $0x144] sm:$0xf]
    %v166 = vld [vmem:[#allocation2 + $0x148] sm:$0xf]
    %v167 = vld [vmem:[#allocation2 + $0x14c] sm:$0xf]
    %v168 = vld [vmem:[#allocation2 + $0x150] sm:$0xf]
    %v169 = vld [vmem:[#allocation2 + $0x154] sm:$0xf]
    %v170 = vld [vmem:[#allocation2 + $0x158] sm:$0xf]
    %v171 = vld [vmem:[#allocation2 + $0x15c] sm:$0xf]
    %v172 = vld [vmem:[#allocation2 + $0x160] sm:$0xf]
    %v173 = vld [vmem:[#allocation2 + $0x164] sm:$0xf]
    %v174 = vld [vmem:[#allocation2 + $0x168] sm:$0xf]
    %v175 = vld [vmem:[#allocation2 + $0x16c] sm:$0xf]
    %v176 = vld [vmem:[#allocation2 + $0x170] sm:$0xf]
    %v177 = vld [vmem:[#allocation2 + $0x174] sm:$0xf]
    %v178 = vld [vmem:[#allocation2 + $0x178] sm:$0xf]
    %v179 = vld [vmem:[#allocation2 + $0x17c] sm:$0xf]
    %v180 = vld [vmem:[#allocation2 + $0x180] sm:$0xf]
    %v181 = vld [vmem:[#allocation2 + $0x184] sm:$0xf]
    %v182 = vld [vmem:[%s2] sm:$0x1]
    %v184 = vperm.slane %v182, 0
    %v284 = vunpack.c.l.b16 %v84
    %v285 = vunpack.c.l.b16 %v85
    %v286 = vunpack.c.l.b16 %v86
    %v287 = vunpack.c.l.b16 %v87
    %v288 = vunpack.c.l.b16 %v88
    %v289 = vunpack.c.l.b16 %v89
    %v290 = vunpack.c.l.b16 %v90
    %v291 = vunpack.c.l.b16 %v91
    %v292 = vunpack.c.l.b16 %v92
    %v293 = vunpack.c.l.b16 %v93
    %v294 = vunpack.c.l.b16 %v94
    %v295 = vunpack.c.l.b16 %v95
    %v296 = vunpack.c.l.b16 %v96
    %v297 = vunpack.c.l.b16 %v97
    %v298 = vunpack.c.l.b16 %v98
    %v299 = vunpack.c.l.b16 %v99
    %v300 = vunpack.c.l.b16 %v100
    %v301 = vunpack.c.l.b16 %v101
    %v302 = vunpack.c.l.b16 %v102
    %v303 = vunpack.c.l.b16 %v103
    %v304 = vunpack.c.l.b16 %v104
    %v305 = vunpack.c.l.b16 %v105
    %v306 = vunpack.c.l.b16 %v106
    %v307 = vunpack.c.l.b16 %v107
    %v308 = vunpack.c.l.b16 %v108
    %v309 = vunpack.c.l.b16 %v109
    %v310 = vunpack.c.l.b16 %v110
    %v311 = vunpack.c.l.b16 %v111
    %v312 = vunpack.c.l.b16 %v112
    %v313 = vunpack.c.l.b16 %v113
    %v314 = vunpack.c.l.b16 %v114
    %v315 = vunpack.c.l.b16 %v115
    %v316 = vunpack.c.l.b16 %v116
    %v317 = vunpack.c.l.b16 %v117
    %v318 = vunpack.c.l.b16 %v118
    %v319 = vunpack.c.l.b16 %v119
    %v320 = vunpack.c.l.b16 %v120
    %v321 = vunpack.c.l.b16 %v121
    %v322 = vunpack.c.l.b16 %v122
    %v323 = vunpack.c.l.b16 %v123
    %v324 = vunpack.c.l.b16 %v124
    %v325 = vunpack.c.l.b16 %v125
    %v326 = vunpack.c.l.b16 %v126
    %v327 = vunpack.c.l.b16 %v127
    %v328 = vunpack.c.l.b16 %v128
    %v329 = vunpack.c.l.b16 %v129
    %v330 = vunpack.c.l.b16 %v130
    %v331 = vunpack.c.l.b16 %v131
    %v332 = vunpack.c.l.b16 %v132
    %v333 = vunpack.c.l.b16 %v133
    %v334 = vunpack.c.l.b16 %v134
    %v335 = vunpack.c.l.b16 %v135
    %v336 = vunpack.c.l.b16 %v136
    %v337 = vunpack.c.l.b16 %v137
    %v338 = vunpack.c.l.b16 %v138
    %v339 = vunpack.c.l.b16 %v139
    %v340 = vunpack.c.l.b16 %v140
    %v341 = vunpack.c.l.b16 %v141
    %v342 = vunpack.c.l.b16 %v142
    %v343 = vunpack.c.l.b16 %v143
    %v344 = vunpack.c.l.b16 %v144
    %v345 = vunpack.c.l.b16 %v145
    %v346 = vunpack.c.l.b16 %v146
    %v347 = vunpack.c.l.b16 %v147
    %v348 = vunpack.c.l.b16 %v148
    %v349 = vunpack.c.l.b16 %v149
    %v350 = vunpack.c.l.b16 %v150
    %v351 = vunpack.c.l.b16 %v151
    %v352 = vunpack.c.l.b16 %v152
    %v353 = vunpack.c.l.b16 %v153
    %v354 = vunpack.c.l.b16 %v154
    %v355 = vunpack.c.l.b16 %v155
    %v356 = vunpack.c.l.b16 %v156
    %v357 = vunpack.c.l.b16 %v157
    %v358 = vunpack.c.l.b16 %v158
    %v359 = vunpack.c.l.b16 %v159
    %v360 = vunpack.c.l.b16 %v160
    %v361 = vunpack.c.l.b16 %v161
    %v362 = vunpack.c.l.b16 %v162
    %v363 = vunpack.c.l.b16 %v163
    %v364 = vunpack.c.l.b16 %v164
    %v365 = vunpack.c.l.b16 %v165
    %v366 = vunpack.c.l.b16 %v166
    %v367 = vunpack.c.l.b16 %v167
    %v368 = vunpack.c.l.b16 %v168
    %v369 = vunpack.c.l.b16 %v169
    %v370 = vunpack.c.l.b16 %v170
    %v371 = vunpack.c.l.b16 %v171
    %v372 = vunpack.c.l.b16 %v172
    %v373 = vunpack.c.l.b16 %v173
    %v374 = vunpack.c.l.b16 %v174
    %v375 = vunpack.c.l.b16 %v175
    %v376 = vunpack.c.l.b16 %v176
    %v377 = vunpack.c.l.b16 %v177
    %v378 = vunpack.c.l.b16 %v178
    %v379 = vunpack.c.l.b16 %v179
    %v380 = vunpack.c.l.b16 %v180
    %v381 = vunpack.c.l.b16 %v181
    %v382 = vpack.c.b16 %v285, %v284
    %v383 = vpack.c.b16 %v287, %v286
    %v384 = vpack.c.b16 %v289, %v288
    %v385 = vpack.c.b16 %v291, %v290
    %v386 = vpack.c.b16 %v293, %v292
    %v387 = vpack.c.b16 %v295, %v294
    %v388 = vpack.c.b16 %v297, %v296
    %v389 = vpack.c.b16 %v299, %v298
    %v390 = vpack.c.b16 %v301, %v300
    %v391 = vpack.c.b16 %v303, %v302
    %v392 = vpack.c.b16 %v305, %v304
    %v393 = vpack.c.b16 %v307, %v306
    %v394 = vpack.c.b16 %v309, %v308
    %v395 = vpack.c.b16 %v311, %v310
    %v396 = vpack.c.b16 %v313, %v312
    %v397 = vpack.c.b16 %v315, %v314
    %v398 = vpack.c.b16 %v317, %v316
    %v399 = vpack.c.b16 %v319, %v318
    %v400 = vpack.c.b16 %v321, %v320
    %v401 = vpack.c.b16 %v323, %v322
    %v402 = vpack.c.b16 %v325, %v324
    %v403 = vpack.c.b16 %v327, %v326
    %v404 = vpack.c.b16 %v329, %v328
    %v405 = vpack.c.b16 %v331, %v330
    %v406 = vpack.c.b16 %v333, %v332
    %v407 = vpack.c.b16 %v335, %v334
    %v408 = vpack.c.b16 %v337, %v336
    %v409 = vpack.c.b16 %v339, %v338
    %v410 = vpack.c.b16 %v341, %v340
    %v411 = vpack.c.b16 %v343, %v342
    %v412 = vpack.c.b16 %v345, %v344
    %v413 = vpack.c.b16 %v347, %v346
    %v414 = vpack.c.b16 %v349, %v348
    %v415 = vpack.c.b16 %v351, %v350
    %v416 = vpack.c.b16 %v353, %v352
    %v417 = vpack.c.b16 %v355, %v354
    %v418 = vpack.c.b16 %v357, %v356
    %v419 = vpack.c.b16 %v359, %v358
    %v420 = vpack.c.b16 %v361, %v360
    %v421 = vpack.c.b16 %v363, %v362
    %v422 = vpack.c.b16 %v365, %v364
    %v423 = vpack.c.b16 %v367, %v366
    %v424 = vpack.c.b16 %v369, %v368
    %v425 = vpack.c.b16 %v371, %v370
    %v426 = vpack.c.b16 %v373, %v372
    %v427 = vpack.c.b16 %v375, %v374
    %v428 = vpack.c.b16 %v377, %v376
    %v429 = vpack.c.b16 %v379, %v378
    %v430 = vpack.c.b16 %v381, %v380
    %vm480 = vcmask 130048
    %v482 = vsel %vm480, %v83, 0
    %484 = vmatpush.bf16.msra.mxu0 %v389
    %485 = vmatpush.bf16.msra.mxu0 %v388
    %486 = vmatpush.bf16.msra.mxu0 %v387
    %487 = vmatpush.bf16.msra.mxu0 %v386
    %488 = vmatpush.bf16.msra.mxu0 %v385
    %489 = vmatpush.bf16.msra.mxu0 %v384
    %490 = vmatpush.bf16.msra.mxu0 %v383
    %491 = vmatpush.bf16.msra.mxu0 %v382
    %492 = vmatmul.bf16.gmra.mxu0 %v77
    %v493 = vpop.f32.mrf.mxu0
    %v494 = vadd.f32 %v184, %v493
    %v495 = vpop.f32.mrf.mxu0
    %496 = vdwg.mxu0
    %497 = vmatpush.bf16.msra.mxu0 %v397
    %498 = vmatpush.bf16.msra.mxu0 %v396
    %499 = vmatpush.bf16.msra.mxu0 %v395
    %500 = vmatpush.bf16.msra.mxu0 %v394
    %501 = vmatpush.bf16.msra.mxu0 %v393
    %502 = vmatpush.bf16.msra.mxu0 %v392
    %503 = vmatpush.bf16.msra.mxu0 %v391
    %504 = vmatpush.bf16.msra.mxu0 %v390
    %505 = vmatmul.bf16.gmra.mxu0 %v78
    %v506 = vpop.f32.mrf.mxu0
    %v507 = vadd.f32 %v494, %v506
    %v508 = vpop.f32.mrf.mxu0
    %509 = vdwg.mxu0
    %510 = vmatpush.bf16.msra.mxu0 %v405
    %511 = vmatpush.bf16.msra.mxu0 %v404
    %512 = vmatpush.bf16.msra.mxu0 %v403
    %513 = vmatpush.bf16.msra.mxu0 %v402
    %514 = vmatpush.bf16.msra.mxu0 %v401
    %515 = vmatpush.bf16.msra.mxu0 %v400
    %516 = vmatpush.bf16.msra.mxu0 %v399
    %517 = vmatpush.bf16.msra.mxu0 %v398
    %518 = vmatmul.bf16.gmra.mxu0 %v79
    %v519 = vpop.f32.mrf.mxu0
    %v520 = vadd.f32 %v507, %v519
    %v521 = vpop.f32.mrf.mxu0
    %522 = vdwg.mxu0
    %523 = vmatpush.bf16.msra.mxu0 %v413
    %524 = vmatpush.bf16.msra.mxu0 %v412
    %525 = vmatpush.bf16.msra.mxu0 %v411
    %526 = vmatpush.bf16.msra.mxu0 %v410
    %527 = vmatpush.bf16.msra.mxu0 %v409
    %528 = vmatpush.bf16.msra.mxu0 %v408
    %529 = vmatpush.bf16.msra.mxu0 %v407
    %530 = vmatpush.bf16.msra.mxu0 %v406
    %531 = vmatmul.bf16.gmra.mxu0 %v80
    %v532 = vpop.f32.mrf.mxu0
    %v533 = vadd.f32 %v520, %v532
    %v534 = vpop.f32.mrf.mxu0
    %535 = vdwg.mxu0
    %536 = vmatpush.bf16.msra.mxu0 %v421
    %537 = vmatpush.bf16.msra.mxu0 %v420
    %538 = vmatpush.bf16.msra.mxu0 %v419
    %539 = vmatpush.bf16.msra.mxu0 %v418
    %540 = vmatpush.bf16.msra.mxu0 %v417
    %541 = vmatpush.bf16.msra.mxu0 %v416
    %542 = vmatpush.bf16.msra.mxu0 %v415
    %543 = vmatpush.bf16.msra.mxu0 %v414
    %544 = vmatmul.bf16.gmra.mxu0 %v81
    %v545 = vpop.f32.mrf.mxu0
    %v546 = vadd.f32 %v533, %v545
    %v547 = vpop.f32.mrf.mxu0
    %548 = vdwg.mxu0
    %549 = vmatpush.bf16.msra.mxu0 %v429
    %550 = vmatpush.bf16.msra.mxu0 %v428
    %551 = vmatpush.bf16.msra.mxu0 %v427
    %552 = vmatpush.bf16.msra.mxu0 %v426
    %553 = vmatpush.bf16.msra.mxu0 %v425
    %554 = vmatpush.bf16.msra.mxu0 %v424
    %555 = vmatpush.bf16.msra.mxu0 %v423
    %556 = vmatpush.bf16.msra.mxu0 %v422
    %557 = vmatmul.bf16.gmra.mxu0 %v82
    %v558 = vpop.f32.mrf.mxu0
    %v559 = vadd.f32 %v546, %v558
    %v560 = vpop.f32.mrf.mxu0
    %561 = vdwg.mxu0
    %562 = vmatpush.bf16.msra.mxu0 0
    %563 = vmatpush.bf16.msra.mxu0 0
    %564 = vmatpush.bf16.msra.mxu0 0
    %565 = vmatpush.bf16.msra.mxu0 0
    %566 = vmatpush.bf16.msra.mxu0 0
    %567 = vmatpush.bf16.msra.mxu0 0
    %568 = vmatpush.bf16.msra.mxu0 0
    %569 = vmatpush.bf16.msra.mxu0 %v430
    %570 = vmatmul.bf16.gmra.mxu0 %v482
    %v571 = vpop.f32.mrf.mxu0
    %v572 = vadd.f32 %v559, %v571
    %v573 = vpop.f32.mrf.mxu0
    %574 = vdwg.mxu0
    %vm575 = vcmask 80896
    %576 = vst.msk [vmem:[#allocation5] sm:$0xff] %vm575, %v572
    // Predicated region
    $region18: #{forward.1} parent=1 // pred_check
      _
    $region19: #{forward.1} parent=1 // pred_check_branch
      %578 = sbr.rel (0) target = $region21
    $region20: #{forward.1} parent=1 // pred_region
      %580 = vsyncadd [#allocation4], 96
      %s581 = sshll.u32 [#allocation5], 4
      %s582 = int_to_ptr.vmem [resolvable:$true] %s581
      %s583 = sshll.u32 %s3, 4
      %s584 = int_to_ptr.hbm [resolvable:$true] %s583
      %589 = dma.vmem_to_hbm [thread:$0]  %s582, 32, %s584, [#allocation4], 32, 32, 2
    $region21: #{forward.1} parent=1 // pred_fallthru
      _
    // Predicated region
    $region22: #{forward.1} parent=1 // pred_check
      _
    $region23: #{forward.1} parent=1 // pred_check_branch
      %591 = sbr.rel (0) target = $region25
    $region24: #{forward.1} parent=1 // pred_region
      %593 = dma.done [#allocation4], 128
    $region25: #{forward.1} parent=1 // pred_fallthru
      _
    %594 = vsyncpa [#allocation3], 1
    %595 = vsyncpa [#allocation4], 1

</llo_original>
